<compile_context>
chip_gen: v5e
topology: v5e:2x2
jax: 0.10.0
libtpu: 0.0.40
codegen_flags: <defaults>
</compile_context>

<pallas_src>
import functools
import math

import jax
import jax.numpy as jnp
from jax import lax
from jax.experimental import pallas as pl
from jax.experimental.pallas import tpu as pltpu


def _round_up(x, m):
    return (x + m - 1) // m * m


def _embed_kernel(idx_ref, table_ref, out_ref):
    """One N-tile.

    idx_ref:   (TN, F)         int32   per-field indices, already shifted by
                                        each field's vocab base offset
    table_ref: (V_pad, D_total) bf16/f32 block-diagonal stacked tables
    out_ref:   (TN, D_total)   f32     concatenated embeddings
    """
    tn, nf = idx_ref.shape
    v_pad = table_ref.shape[0]

    # One iota, reused for every field (JAX does not CSE broadcast_in_dim).
    iota = lax.broadcasted_iota(jnp.int32, (tn, v_pad), 1)

    # Combined one-hot: each field's shifted index lands in a disjoint column
    # range, so boolean masks can simply be OR-ed, then converted once.
    mask = iota == idx_ref[:, 0:1]
    for f in range(1, nf):  # F is small & static -> unrolled
        mask = mask | (iota == idx_ref[:, f:f + 1])
    onehot = mask.astype(table_ref.dtype)  # exact: values are 0/1

    # Single fused gather-as-matmul on the MXU, f32 accumulation, one store
    # of exactly D_total lanes.
    out_ref[...] = jnp.dot(onehot, table_ref[...],
                           preferred_element_type=jnp.float32
                           ).astype(out_ref.dtype)


def link_feature_embedding(x, table_blockdiag, vocab_offsets, vocab_sizes, *,
                           tile_n=1024, out_dtype=jnp.float32):
    """x: (B, S, F) integer indices; table_blockdiag: (V_pad, D_total)."""
    B, S, F = x.shape
    N = B * S
    v_pad, d_total = table_blockdiag.shape

    # Row tile: big (per-step overhead ~0.35us), multiple of 8, but clamped so
    # the grid has >= 2 steps and v7x's two TensorCores can both run.  The
    # extra step is negligible on single-TC v5e/v6e.
    tile_n = min(tile_n, _round_up(pl.cdiv(N, 2), 8))
    tile_n = max(8, min(tile_n, _round_up(N, 8)))
    n_pad = _round_up(N, tile_n)

    voffs = jnp.asarray(vocab_offsets, dtype=jnp.int32)
    vsizes = jnp.asarray(vocab_sizes, dtype=jnp.int32)

    idx = x.reshape(N, F).astype(jnp.int32)
    # Clip per-field so OOB / negative indices can never select rows from an
    # adjacent field's block (nn.Embedding would error on such inputs anyway),
    # then fold the per-field vocab base offsets in here so the kernel only
    # does compares.
    idx = jnp.clip(idx, 0, vsizes[None, :] - 1) + voffs[None, :]
    if n_pad != N:
        idx = jnp.pad(idx, ((0, n_pad - N), (0, 0)))

    # VMEM budget (real bytes, VMEM layouts lane-pad the last dim to 128):
    #   idx / out tiles double-buffered, table conservatively double-buffered,
    #   plus iota + bool mask + one-hot intermediates; +50% headroom.
    tbytes = jnp.dtype(table_blockdiag.dtype).itemsize
    obytes = jnp.dtype(out_dtype).itemsize
    lane = lambda d: _round_up(d, 128)
    vmem_bytes = (
        2 * tile_n * lane(F) * 4
        + 2 * v_pad * lane(d_total) * tbytes
        + 2 * tile_n * lane(d_total) * obytes
        + tile_n * v_pad * (4 + 4 + tbytes)
    )
    vmem_bytes = int(min(48 << 20, max(8 << 20, int(vmem_bytes * 1.5))))

    out = pl.pallas_call(
        _embed_kernel,
        out_shape=jax.ShapeDtypeStruct((n_pad, d_total), out_dtype),
        grid=(n_pad // tile_n,),
        in_specs=[
            pl.BlockSpec((tile_n, F), lambda i: (i, 0)),
            # Same (small) table block every step; constant index_map means
            # Pallas skips re-fetching it across grid iterations.
            pl.BlockSpec((v_pad, d_total), lambda i: (0, 0)),
        ],
        # Last dim == full array dim (40), so the non-multiple-of-128 block is
        # legal; we write exactly D_total lanes instead of a padded 128.
        out_specs=pl.BlockSpec((tile_n, d_total), lambda i: (i, 0)),
        compiler_params=pltpu.CompilerParams(
            dimension_semantics=("parallel",),   # megacore split on v7x
            vmem_limit_bytes=vmem_bytes),
    )(idx, table_blockdiag)

    if n_pad != N:
        out = out[:N]
    return out.reshape(B, S, d_total)


def make_embedding_tables(key, feature_ranges, embedding_dims,
                          dtype=jnp.bfloat16):
    """Xavier-uniform init (matching nn.init.xavier_uniform_ bounds), packed
    into a single block-diagonal (V_pad, D_total) matrix.  Only the vocab
    axis is padded (to 128, for a lane-dense one-hot / matmul K dim); the
    feature axis stays at D_total so the kernel writes no padded lanes.

    Tables are stored in `dtype` (bf16 by default for native MXU rate); pass
    dtype=jnp.float32 if bf16-rounded embedding values are unacceptable."""
    vocab_sizes = [r + 1 for r in feature_ranges]
    d_total = int(sum(embedding_dims))
    v_total = int(sum(vocab_sizes))
    v_pad = _round_up(v_total, 128)

    table = jnp.zeros((v_pad, d_total), dtype=dtype)
    keys = jax.random.split(key, len(vocab_sizes))
    raw_tables, vocab_offsets = [], []
    v_off = d_off = 0
    for f, (v, d) in enumerate(zip(vocab_sizes, embedding_dims)):
        # torch xavier_uniform_ on weight (v, d): gain*sqrt(6/(fan_in+fan_out))
        bound = math.sqrt(6.0 / (v + d))
        w = jax.random.uniform(keys[f], (v, d), minval=-bound, maxval=bound,
                               dtype=jnp.float32).astype(dtype)
        table = table.at[v_off:v_off + v, d_off:d_off + d].set(w)
        raw_tables.append(w)
        vocab_offsets.append(v_off)
        v_off += v
        d_off += d
    return table, vocab_offsets, vocab_sizes, raw_tables


def reference_forward(x, raw_tables):
    """Pure-JAX reference of the PyTorch forward (same weights as the kernel)."""
    outs = [jnp.take(w, x[:, :, i], axis=0).astype(jnp.float32)
            for i, w in enumerate(raw_tables)]
    return jnp.concatenate(outs, axis=-1)


if __name__ == "__main__":
    # Small shapes consistent with the module: x is (batch, seq, num_fields).
    feature_ranges = [10, 20, 15, 8]
    embedding_dims = [8, 16, 8, 8]          # D_total = 40
    B, S = 4, 64                            # N = 256 rows
    F = len(feature_ranges)

    key = jax.random.PRNGKey(0)
    k_tab, k_idx = jax.random.split(key)

    table_blockdiag, vocab_offsets, vocab_sizes, raw_tables = \
        make_embedding_tables(k_tab, feature_ranges, embedding_dims)

    # Indices per field in [0, range_i] (inclusive, since vocab = range + 1).
    idx_keys = jax.random.split(k_idx, F)
    cols = [jax.random.randint(idx_keys[i], (B, S, 1), 0, feature_ranges[i] + 1)
            for i in range(F)]
    x = jnp.concatenate(cols, axis=-1).astype(jnp.int32)   # (B, S, F)

    d_total = int(sum(embedding_dims))
    out = link_feature_embedding(x, table_blockdiag, vocab_offsets,
                                 vocab_sizes)
    out = jax.block_until_ready(out)

    # Reference uses the identical (bf16-stored) weights, and the one-hot
    # matmul selects rows exactly, so this comparison is tight.
    ref = reference_forward(x, raw_tables)
    assert out.shape == (B, S, d_total)
    assert jnp.allclose(out, ref, atol=1e-6, rtol=1e-6), "mismatch vs reference"

    print("KERNEL_OK")
</pallas_src>

<mosaic_0001>
module attributes {stable_mosaic.version = 11 : i64} {
  func.func @_embed_kernel(%arg0: i32, %arg1: memref<128x4xi32, #tpu.memory_space<vmem>>, %arg2: memref<128x40xbf16, #tpu.memory_space<vmem>>, %arg3: memref<128x40xf32, #tpu.memory_space<vmem>>) attributes {dimension_semantics = [#tpu.dimension_semantics<parallel>], iteration_bounds = array<i64: 2>, scalar_prefetch = 0 : i64, scratch_operands = 0 : i64, tpu.core_type = #tpu.core_type<tc>, window_params = [{transform_indices = @transform_0, window_bounds = array<i64: 128, 4>}, {pipeline_mode = #tpu.pipeline_mode<synchronous>, transform_indices = @transform_1, window_bounds = array<i64: 128, 40>}, {transform_indices = @transform_2, window_bounds = array<i64: 128, 40>}]} {
    %0 = tpu.iota {dimensions = array<i32: 1>} : vector<128x128xi32>
    %c0 = arith.constant 0 : index
    %c0_0 = arith.constant 0 : index
    %1 = vector.load %arg1[%c0, %c0_0] : memref<128x4xi32, #tpu.memory_space<vmem>>, vector<128x1xi32>
    %2 = vector.broadcast %1 : vector<128x1xi32> to vector<128x128xi32>
    %3 = arith.cmpi eq, %0, %2 : vector<128x128xi32>
    %c0_1 = arith.constant 0 : index
    %c1 = arith.constant 1 : index
    %4 = vector.load %arg1[%c0_1, %c1] : memref<128x4xi32, #tpu.memory_space<vmem>>, vector<128x1xi32>
    %5 = vector.broadcast %4 : vector<128x1xi32> to vector<128x128xi32>
    %6 = arith.cmpi eq, %0, %5 : vector<128x128xi32>
    %7 = arith.ori %3, %6 : vector<128x128xi1>
    %c0_2 = arith.constant 0 : index
    %c2 = arith.constant 2 : index
    %8 = vector.load %arg1[%c0_2, %c2] : memref<128x4xi32, #tpu.memory_space<vmem>>, vector<128x1xi32>
    %9 = vector.broadcast %8 : vector<128x1xi32> to vector<128x128xi32>
    %10 = arith.cmpi eq, %0, %9 : vector<128x128xi32>
    %11 = arith.ori %7, %10 : vector<128x128xi1>
    %c0_3 = arith.constant 0 : index
    %c3 = arith.constant 3 : index
    %12 = vector.load %arg1[%c0_3, %c3] : memref<128x4xi32, #tpu.memory_space<vmem>>, vector<128x1xi32>
    %13 = vector.broadcast %12 : vector<128x1xi32> to vector<128x128xi32>
    %14 = arith.cmpi eq, %0, %13 : vector<128x128xi32>
    %15 = arith.ori %11, %14 : vector<128x128xi1>
    %16 = arith.extui %15 : vector<128x128xi1> to vector<128x128xi32>
    %17 = arith.sitofp %16 : vector<128x128xi32> to vector<128x128xf32>
    %18 = arith.truncf %17 : vector<128x128xf32> to vector<128x128xbf16>
    %c0_4 = arith.constant 0 : index
    %c0_5 = arith.constant 0 : index
    %19 = vector.load %arg2[%c0_4, %c0_5] : memref<128x40xbf16, #tpu.memory_space<vmem>>, vector<128x40xbf16>
    %cst = arith.constant dense<0.000000e+00> : vector<128x40xf32>
    %20 = tpu.matmul %18, %19, %cst {dimension_numbers = #tpu.dot_dimension_numbers<[1], [0], [0], [1], [0, 0, 1, 1], [], []>} : vector<128x128xbf16>, vector<128x40xbf16>, vector<128x40xf32> -> vector<128x40xf32>
    %c0_6 = arith.constant 0 : index
    %c0_7 = arith.constant 0 : index
    %21 = vector.load %arg3[%c0_6, %c0_7] : memref<128x40xf32, #tpu.memory_space<vmem>>, vector<128x40xf32>
    tpu.vector_store %arg3[%c0_6, %c0_7], %20 {strides = array<i32>} : memref<128x40xf32, #tpu.memory_space<vmem>>, vector<128x40xf32>,
    return
  }
  func.func @transform_0(%arg0: i32) -> (i32, i32) {
    %c0_i32 = arith.constant 0 : i32
    %c0_i32_0 = arith.constant 0 : i32
    return %arg0, %c0_i32 : i32, i32
  }
  func.func @transform_1(%arg0: i32) -> (i32, i32) {
    %c0_i32 = arith.constant 0 : i32
    %c0_i32_0 = arith.constant 0 : i32
    %c0_i32_1 = arith.constant 0 : i32
    return %c0_i32, %c0_i32_0 : i32, i32
  }
  func.func @transform_2(%arg0: i32) -> (i32, i32) {
    %c0_i32 = arith.constant 0 : i32
    %c0_i32_0 = arith.constant 0 : i32
    return %arg0, %c0_i32 : i32, i32
  }
}

</mosaic_0001>

<llo_original>
// kernel: tpu_custom_call.1
$region0: #{tpu_custom_call.1}
  #allocation0 [shape = 'u32[]', space=smem, size = 0x4, offset = 0x4, fixed_abs, tag = 'smem constant byte address 0x4 - core index']
  #allocation1 [shape = 'u32[72,128]{1,0:T(1,128)}', space=vmem, size = 0x9000, scoped, tag = 'internal scratch']
  %s0 = inlined_call_operand.vmem [shape: s32[256,4], index: 0, kind: input, shape index: {}]
  %s1 = inlined_call_operand.vmem [shape: bf16[128,40], index: 1, kind: input, shape index: {}]
  %s2 = inlined_call_operand.vmem [shape: f32[256,40], index: 2, kind: output, shape index: {}]
  %s3 = sld [smem:[#allocation0]]
  $region41: #{tpu_custom_call.1} parent=0
    _
  %s5 = ssub.s32 1, %s3
  %s6 = scalar_select 0, %s5, %s3
  loop: start=0, step=1, limit=4
  $region2: #{tpu_custom_call.1} parent=0 // loop_pre_header
    _
  $region3: #{tpu_custom_call.1} parent=0 // loop_header
    %s8 = sphi 0, %s12
    %p9 = scmp.ge.s32.totalorder %s8, 4
    %s18 = sphi 0, %s20
    %s21 = sphi 0, %s18
    %s22 = sphi 0, %s21
    %s38 = sphi 0, %s22
    %s42 = sphi 0, %s42
    %s44 = sphi 0, %s42
    %s45 = sphi 0, %s44
    %s59 = sphi 0, %s45
    %s65 = sphi 0, %s67
    %s68 = sphi 0, %s65
    %s69 = sphi 0, %s68
    %s85 = sphi 0, %s69
  $region4: #{tpu_custom_call.1} parent=0 // loop_header_branch
    %11 = sbr.rel (%p9) target = $region8
  $region5: #{tpu_custom_call.1} parent=0 // loop_body
    %s13 = ssub.s32 %s8, 1
    %s14 = ssub.s32 %s8, 2
    %s15 = sadd.s32 %s8, 1
    %s16 = ssub.s32 %s8, %s15
    %p17 = scmp.eq.s32.totalorder %s16, 0
    %s19 = sadd.s32 %s18, 1
    %s20 = scalar_select %p17, %s18, %s19
    %p23 = pneg %p17
    %p24 = scmp.eq.s32.totalorder %s8, 1
    %p25 = por %p23, %p24
    %p26 = scmp.ne.s32.totalorder %s18, %s21
    %p27 = scmp.eq.s32.totalorder %s8, 0
    %p28 = por %p26, %p27
    %p29 = scmp.ne.s32.totalorder %s18, %s21
    %p30 = scmp.eq.s32.totalorder %s13, 1
    %p31 = por %p29, %p30
    %p32 = scmp.ne.s32.totalorder %s21, %s22
    %p33 = scmp.eq.s32.totalorder %s13, 0
    %p34 = por %p32, %p33
    %p35 = scmp.ne.s32.totalorder %s21, %s22
    %p36 = scmp.eq.s32.totalorder %s14, 1
    %p37 = por %p35, %p36
    %p39 = scmp.ne.s32.totalorder %s22, %s38
    %p40 = scmp.eq.s32.totalorder %s14, 0
    %p41 = por %p39, %p40
    %s43 = sadd.s32 %s42, 1
    %p46 = scmp.eq.s32.totalorder %s8, 1
    %p47 = scmp.ne.s32.totalorder %s42, %s44
    %p48 = scmp.eq.s32.totalorder %s8, 0
    %p49 = por %p47, %p48
    %p50 = scmp.ne.s32.totalorder %s42, %s44
    %p51 = scmp.eq.s32.totalorder %s13, 1
    %p52 = por %p50, %p51
    %p53 = scmp.ne.s32.totalorder %s44, %s45
    %p54 = scmp.eq.s32.totalorder %s13, 0
    %p55 = por %p53, %p54
    %p56 = scmp.ne.s32.totalorder %s44, %s45
    %p57 = scmp.eq.s32.totalorder %s14, 1
    %p58 = por %p56, %p57
    %p60 = scmp.ne.s32.totalorder %s45, %s59
    %p61 = scmp.eq.s32.totalorder %s14, 0
    %p62 = por %p60, %p61
    %s63 = ssub.s32 %s8, %s15
    %p64 = scmp.eq.s32.totalorder %s63, 0
    %s66 = sadd.s32 %s65, 1
    %s67 = scalar_select %p64, %s65, %s66
    %p70 = pneg %p64
    %p71 = scmp.eq.s32.totalorder %s8, 1
    %p72 = por %p70, %p71
    %p73 = scmp.ne.s32.totalorder %s65, %s68
    %p74 = scmp.eq.s32.totalorder %s8, 0
    %p75 = por %p73, %p74
    %p76 = scmp.ne.s32.totalorder %s65, %s68
    %p77 = scmp.eq.s32.totalorder %s13, 1
    %p78 = por %p76, %p77
    %p79 = scmp.ne.s32.totalorder %s68, %s69
    %p80 = scmp.eq.s32.totalorder %s13, 0
    %p81 = por %p79, %p80
    %p82 = scmp.ne.s32.totalorder %s68, %s69
    %p83 = scmp.eq.s32.totalorder %s14, 1
    %p84 = por %p82, %p83
    %p86 = scmp.ne.s32.totalorder %s69, %s85
    %p87 = scmp.eq.s32.totalorder %s14, 0
    %p88 = por %p86, %p87
    %p89 = scmp.le.s32.totalorder 1, %s8
    %p90 = scmp.lt.s32.totalorder %s8, 3
    %p91 = pnand %p89, %p90
    %p92 = pneg %p91
    // Predicated region
    $region9: #{tpu_custom_call.1} parent=5 // pred_check
      _
    $region10: #{tpu_custom_call.1} parent=5 // pred_check_branch
      %94 = sbr.rel (%p91) target = $region12
    $region11: #{tpu_custom_call.1} parent=5 // pred_region
      %s95 = ssub.s32 %s8, 1
      // Predicated region
      $region13: #{tpu_custom_call.1} parent=11 // pred_check
        %p96 = pneg %p55
      $region14: #{tpu_custom_call.1} parent=11 // pred_check_branch
        %98 = sbr.rel (%p96) target = $region16
      $region15: #{tpu_custom_call.1} parent=11 // pred_region
        _
      $region16: #{tpu_custom_call.1} parent=11 // pred_fallthru
        _
    $region12: #{tpu_custom_call.1} parent=5 // pred_fallthru
      _
    %p99 = scmp.lt.s32.totalorder %s8, 2
    // Predicated region
    $region17: #{tpu_custom_call.1} parent=5 // pred_check
      %p100 = pneg %p99
    $region18: #{tpu_custom_call.1} parent=5 // pred_check_branch
      %102 = sbr.rel (%p100) target = $region20
    $region19: #{tpu_custom_call.1} parent=5 // pred_region
      // Predicated region
      $region21: #{tpu_custom_call.1} parent=19 // pred_check
        %p103 = pneg %p28
      $region22: #{tpu_custom_call.1} parent=19 // pred_check_branch
        %105 = sbr.rel (%p103) target = $region24
      $region23: #{tpu_custom_call.1} parent=19 // pred_region
        %s106 = smul.u32 16, %s8
        %p107 = scmp.lt.s32.totalorder %s106, 31
        %s108 = scalar_select %p107, %s106, 31
        %s109 = smul.addr %s108, 8
        %s110 = scalar_lea.vmem %s0, %s109
        %s111 = smul.u32 16, %s8
      $region24: #{tpu_custom_call.1} parent=19 // pred_fallthru
        _
    $region20: #{tpu_custom_call.1} parent=5 // pred_fallthru
      _
    %p112 = scmp.le.s32.totalorder 1, %s8
    %p113 = scmp.lt.s32.totalorder %s8, 3
    %p114 = pnand %p112, %p113
    %p115 = pneg %p114
    // Predicated region
    $region25: #{tpu_custom_call.1} parent=5 // pred_check
      _
    $region26: #{tpu_custom_call.1} parent=5 // pred_check_branch
      %117 = sbr.rel (%p114) target = $region28
    $region27: #{tpu_custom_call.1} parent=5 // pred_region
      %s118 = ssub.s32 %s8, 1
      %s119 = smul.u32 16, %s13
      %p120 = scmp.lt.s32.totalorder %s119, 31
      %s121 = scalar_select %p120, %s119, 31
      %s122 = smul.addr %s121, 8
      %s123 = scalar_lea.vmem %s0, %s122
      %p124 = pneg %p34
      %p125 = pneg %p31
      %p126 = pneg %p55
      %p127 = pneg %p52
      %p128 = pneg %p81
      %p129 = pneg %p78
      %s130 = smul.u32 16, %s13
      %p131 = scmp.lt.s32.totalorder %s130, 31
      %s132 = scalar_select %p131, %s130, 31
      %s133 = smul.addr %s132, 8
      %s134 = scalar_lea.vmem %s2, %s133
      %s135 = smul.u32 16, %s13
      %p136 = scmp.lt.s32.totalorder %s135, 31
      %s137 = scalar_select %p136, %s135, 31
      %s138 = smul.addr %s137, 8
      %s139 = scalar_lea.vmem %s0, %s138
      %s140 = smul.u32 16, %s13
      %s141 = smul.u32 16, %s13
      %p142 = scmp.lt.s32.totalorder %s141, 31
      %s143 = scalar_select %p142, %s141, 31
      %s144 = smul.addr %s143, 8
      %s145 = scalar_lea.vmem %s2, %s144
      %s146 = smul.u32 16, %s13
      %v147 = vlaneseq
      %v148 = vand.u32 %v147, 127
      %v149 = vld [vmem:[%s139] sm:$0xff]
      %v150 = vld [vmem:[%s139 + $0x8] sm:$0xff]
      %v151 = vld [vmem:[%s139 + $0x10] sm:$0xff]
      %v152 = vld [vmem:[%s139 + $0x18] sm:$0xff]
      %v153 = vld [vmem:[%s139 + $0x20] sm:$0xff]
      %v154 = vld [vmem:[%s139 + $0x28] sm:$0xff]
      %v155 = vld [vmem:[%s139 + $0x30] sm:$0xff]
      %v156 = vld [vmem:[%s139 + $0x38] sm:$0xff]
      %v157 = vld [vmem:[%s139 + $0x40] sm:$0xff]
      %v158 = vld [vmem:[%s139 + $0x48] sm:$0xff]
      %v159 = vld [vmem:[%s139 + $0x50] sm:$0xff]
      %v160 = vld [vmem:[%s139 + $0x58] sm:$0xff]
      %v161 = vld [vmem:[%s139 + $0x60] sm:$0xff]
      %v162 = vld [vmem:[%s139 + $0x68] sm:$0xff]
      %v163 = vld [vmem:[%s139 + $0x70] sm:$0xff]
      %v164 = vld [vmem:[%s139 + $0x78] sm:$0xff]
      %165 = vset.pattern.permute.xlu0 0
      %166 = vperm.xlu0 %165, %v149
      %v167 = vpop.permute.xlu0 %166
      %168 = vset.pattern.permute.xlu0 0
      %169 = vperm.xlu0 %168, %v150
      %v170 = vpop.permute.xlu0 %169
      %171 = vset.pattern.permute.xlu0 0
      %172 = vperm.xlu0 %171, %v151
      %v173 = vpop.permute.xlu0 %172
      %174 = vset.pattern.permute.xlu0 0
      %175 = vperm.xlu0 %174, %v152
      %v176 = vpop.permute.xlu0 %175
      %177 = vset.pattern.permute.xlu0 0
      %178 = vperm.xlu0 %177, %v153
      %v179 = vpop.permute.xlu0 %178
      %180 = vset.pattern.permute.xlu0 0
      %181 = vperm.xlu0 %180, %v154
      %v182 = vpop.permute.xlu0 %181
      %183 = vset.pattern.permute.xlu0 0
      %184 = vperm.xlu0 %183, %v155
      %v185 = vpop.permute.xlu0 %184
      %186 = vset.pattern.permute.xlu0 0
      %187 = vperm.xlu0 %186, %v156
      %v188 = vpop.permute.xlu0 %187
      %189 = vset.pattern.permute.xlu0 0
      %190 = vperm.xlu0 %189, %v157
      %v191 = vpop.permute.xlu0 %190
      %192 = vset.pattern.permute.xlu0 0
      %193 = vperm.xlu0 %192, %v158
      %v194 = vpop.permute.xlu0 %193
      %195 = vset.pattern.permute.xlu0 0
      %196 = vperm.xlu0 %195, %v159
      %v197 = vpop.permute.xlu0 %196
      %198 = vset.pattern.permute.xlu0 0
      %199 = vperm.xlu0 %198, %v160
      %v200 = vpop.permute.xlu0 %199
      %201 = vset.pattern.permute.xlu0 0
      %202 = vperm.xlu0 %201, %v161
      %v203 = vpop.permute.xlu0 %202
      %204 = vset.pattern.permute.xlu0 0
      %205 = vperm.xlu0 %204, %v162
      %v206 = vpop.permute.xlu0 %205
      %207 = vset.pattern.permute.xlu0 0
      %208 = vperm.xlu0 %207, %v163
      %v209 = vpop.permute.xlu0 %208
      %210 = vset.pattern.permute.xlu0 0
      %211 = vperm.xlu0 %210, %v164
      %v212 = vpop.permute.xlu0 %211
      %vm213 = vcmp.eq.s32.totalorder %v148, %v167
      %vm214 = vcmp.eq.s32.totalorder %v148, %v170
      %vm215 = vcmp.eq.s32.totalorder %v148, %v173
      %vm216 = vcmp.eq.s32.totalorder %v148, %v176
      %vm217 = vcmp.eq.s32.totalorder %v148, %v179
      %vm218 = vcmp.eq.s32.totalorder %v148, %v182
      %vm219 = vcmp.eq.s32.totalorder %v148, %v185
      %vm220 = vcmp.eq.s32.totalorder %v148, %v188
      %vm221 = vcmp.eq.s32.totalorder %v148, %v191
      %vm222 = vcmp.eq.s32.totalorder %v148, %v194
      %vm223 = vcmp.eq.s32.totalorder %v148, %v197
      %vm224 = vcmp.eq.s32.totalorder %v148, %v200
      %vm225 = vcmp.eq.s32.totalorder %v148, %v203
      %vm226 = vcmp.eq.s32.totalorder %v148, %v206
      %vm227 = vcmp.eq.s32.totalorder %v148, %v209
      %vm228 = vcmp.eq.s32.totalorder %v148, %v212
      %229 = vset.pattern.permute.xlu0 1
      %230 = vperm.xlu0 %229, %v149
      %v231 = vpop.permute.xlu0 %230
      %232 = vset.pattern.permute.xlu0 1
      %233 = vperm.xlu0 %232, %v150
      %v234 = vpop.permute.xlu0 %233
      %235 = vset.pattern.permute.xlu0 1
      %236 = vperm.xlu0 %235, %v151
      %v237 = vpop.permute.xlu0 %236
      %238 = vset.pattern.permute.xlu0 1
      %239 = vperm.xlu0 %238, %v152
      %v240 = vpop.permute.xlu0 %239
      %241 = vset.pattern.permute.xlu0 1
      %242 = vperm.xlu0 %241, %v153
      %v243 = vpop.permute.xlu0 %242
      %244 = vset.pattern.permute.xlu0 1
      %245 = vperm.xlu0 %244, %v154
      %v246 = vpop.permute.xlu0 %245
      %247 = vset.pattern.permute.xlu0 1
      %248 = vperm.xlu0 %247, %v155
      %v249 = vpop.permute.xlu0 %248
      %250 = vset.pattern.permute.xlu0 1
      %251 = vperm.xlu0 %250, %v156
      %v252 = vpop.permute.xlu0 %251
      %253 = vset.pattern.permute.xlu0 1
      %254 = vperm.xlu0 %253, %v157
      %v255 = vpop.permute.xlu0 %254
      %256 = vset.pattern.permute.xlu0 1
      %257 = vperm.xlu0 %256, %v158
      %v258 = vpop.permute.xlu0 %257
      %259 = vset.pattern.permute.xlu0 1
      %260 = vperm.xlu0 %259, %v159
      %v261 = vpop.permute.xlu0 %260
      %262 = vset.pattern.permute.xlu0 1
      %263 = vperm.xlu0 %262, %v160
      %v264 = vpop.permute.xlu0 %263
      %265 = vset.pattern.permute.xlu0 1
      %266 = vperm.xlu0 %265, %v161
      %v267 = vpop.permute.xlu0 %266
      %268 = vset.pattern.permute.xlu0 1
      %269 = vperm.xlu0 %268, %v162
      %v270 = vpop.permute.xlu0 %269
      %271 = vset.pattern.permute.xlu0 1
      %272 = vperm.xlu0 %271, %v163
      %v273 = vpop.permute.xlu0 %272
      %274 = vset.pattern.permute.xlu0 1
      %275 = vperm.xlu0 %274, %v164
      %v276 = vpop.permute.xlu0 %275
      %vm277 = vcmp.eq.s32.totalorder %v148, %v231
      %vm278 = vcmp.eq.s32.totalorder %v148, %v234
      %vm279 = vcmp.eq.s32.totalorder %v148, %v237
      %vm280 = vcmp.eq.s32.totalorder %v148, %v240
      %vm281 = vcmp.eq.s32.totalorder %v148, %v243
      %vm282 = vcmp.eq.s32.totalorder %v148, %v246
      %vm283 = vcmp.eq.s32.totalorder %v148, %v249
      %vm284 = vcmp.eq.s32.totalorder %v148, %v252
      %vm285 = vcmp.eq.s32.totalorder %v148, %v255
      %vm286 = vcmp.eq.s32.totalorder %v148, %v258
      %vm287 = vcmp.eq.s32.totalorder %v148, %v261
      %vm288 = vcmp.eq.s32.totalorder %v148, %v264
      %vm289 = vcmp.eq.s32.totalorder %v148, %v267
      %vm290 = vcmp.eq.s32.totalorder %v148, %v270
      %vm291 = vcmp.eq.s32.totalorder %v148, %v273
      %vm292 = vcmp.eq.s32.totalorder %v148, %v276
      %vm293 = vmor %vm213, %vm277
      %vm294 = vmor %vm214, %vm278
      %vm295 = vmor %vm215, %vm279
      %vm296 = vmor %vm216, %vm280
      %vm297 = vmor %vm217, %vm281
      %vm298 = vmor %vm218, %vm282
      %vm299 = vmor %vm219, %vm283
      %vm300 = vmor %vm220, %vm284
      %vm301 = vmor %vm221, %vm285
      %vm302 = vmor %vm222, %vm286
      %vm303 = vmor %vm223, %vm287
      %vm304 = vmor %vm224, %vm288
      %vm305 = vmor %vm225, %vm289
      %vm306 = vmor %vm226, %vm290
      %vm307 = vmor %vm227, %vm291
      %vm308 = vmor %vm228, %vm292
      %309 = vset.pattern.permute.xlu0 2
      %310 = vperm.xlu0 %309, %v149
      %v311 = vpop.permute.xlu0 %310
      %312 = vset.pattern.permute.xlu0 2
      %313 = vperm.xlu0 %312, %v150
      %v314 = vpop.permute.xlu0 %313
      %315 = vset.pattern.permute.xlu0 2
      %316 = vperm.xlu0 %315, %v151
      %v317 = vpop.permute.xlu0 %316
      %318 = vset.pattern.permute.xlu0 2
      %319 = vperm.xlu0 %318, %v152
      %v320 = vpop.permute.xlu0 %319
      %321 = vset.pattern.permute.xlu0 2
      %322 = vperm.xlu0 %321, %v153
      %v323 = vpop.permute.xlu0 %322
      %324 = vset.pattern.permute.xlu0 2
      %325 = vperm.xlu0 %324, %v154
      %v326 = vpop.permute.xlu0 %325
      %327 = vset.pattern.permute.xlu0 2
      %328 = vperm.xlu0 %327, %v155
      %v329 = vpop.permute.xlu0 %328
      %330 = vset.pattern.permute.xlu0 2
      %331 = vperm.xlu0 %330, %v156
      %v332 = vpop.permute.xlu0 %331
      %333 = vset.pattern.permute.xlu0 2
      %334 = vperm.xlu0 %333, %v157
      %v335 = vpop.permute.xlu0 %334
      %336 = vset.pattern.permute.xlu0 2
      %337 = vperm.xlu0 %336, %v158
      %v338 = vpop.permute.xlu0 %337
      %339 = vset.pattern.permute.xlu0 2
      %340 = vperm.xlu0 %339, %v159
      %v341 = vpop.permute.xlu0 %340
      %342 = vset.pattern.permute.xlu0 2
      %343 = vperm.xlu0 %342, %v160
      %v344 = vpop.permute.xlu0 %343
      %345 = vset.pattern.permute.xlu0 2
      %346 = vperm.xlu0 %345, %v161
      %v347 = vpop.permute.xlu0 %346
      %348 = vset.pattern.permute.xlu0 2
      %349 = vperm.xlu0 %348, %v162
      %v350 = vpop.permute.xlu0 %349
      %351 = vset.pattern.permute.xlu0 2
      %352 = vperm.xlu0 %351, %v163
      %v353 = vpop.permute.xlu0 %352
      %354 = vset.pattern.permute.xlu0 2
      %355 = vperm.xlu0 %354, %v164
      %v356 = vpop.permute.xlu0 %355
      %vm357 = vcmp.eq.s32.totalorder %v148, %v311
      %vm358 = vcmp.eq.s32.totalorder %v148, %v314
      %vm359 = vcmp.eq.s32.totalorder %v148, %v317
      %vm360 = vcmp.eq.s32.totalorder %v148, %v320
      %vm361 = vcmp.eq.s32.totalorder %v148, %v323
      %vm362 = vcmp.eq.s32.totalorder %v148, %v326
      %vm363 = vcmp.eq.s32.totalorder %v148, %v329
      %vm364 = vcmp.eq.s32.totalorder %v148, %v332
      %vm365 = vcmp.eq.s32.totalorder %v148, %v335
      %vm366 = vcmp.eq.s32.totalorder %v148, %v338
      %vm367 = vcmp.eq.s32.totalorder %v148, %v341
      %vm368 = vcmp.eq.s32.totalorder %v148, %v344
      %vm369 = vcmp.eq.s32.totalorder %v148, %v347
      %vm370 = vcmp.eq.s32.totalorder %v148, %v350
      %vm371 = vcmp.eq.s32.totalorder %v148, %v353
      %vm372 = vcmp.eq.s32.totalorder %v148, %v356
      %vm373 = vmor %vm293, %vm357
      %vm374 = vmor %vm294, %vm358
      %vm375 = vmor %vm295, %vm359
      %vm376 = vmor %vm296, %vm360
      %vm377 = vmor %vm297, %vm361
      %vm378 = vmor %vm298, %vm362
      %vm379 = vmor %vm299, %vm363
      %vm380 = vmor %vm300, %vm364
      %vm381 = vmor %vm301, %vm365
      %vm382 = vmor %vm302, %vm366
      %vm383 = vmor %vm303, %vm367
      %vm384 = vmor %vm304, %vm368
      %vm385 = vmor %vm305, %vm369
      %vm386 = vmor %vm306, %vm370
      %vm387 = vmor %vm307, %vm371
      %vm388 = vmor %vm308, %vm372
      %389 = vset.pattern.permute.xlu0 3
      %390 = vperm.xlu0 %389, %v149
      %v391 = vpop.permute.xlu0 %390
      %392 = vset.pattern.permute.xlu0 3
      %393 = vperm.xlu0 %392, %v150
      %v394 = vpop.permute.xlu0 %393
      %395 = vset.pattern.permute.xlu0 3
      %396 = vperm.xlu0 %395, %v151
      %v397 = vpop.permute.xlu0 %396
      %398 = vset.pattern.permute.xlu0 3
      %399 = vperm.xlu0 %398, %v152
      %v400 = vpop.permute.xlu0 %399
      %401 = vset.pattern.permute.xlu0 3
      %402 = vperm.xlu0 %401, %v153
      %v403 = vpop.permute.xlu0 %402
      %404 = vset.pattern.permute.xlu0 3
      %405 = vperm.xlu0 %404, %v154
      %v406 = vpop.permute.xlu0 %405
      %407 = vset.pattern.permute.xlu0 3
      %408 = vperm.xlu0 %407, %v155
      %v409 = vpop.permute.xlu0 %408
      %410 = vset.pattern.permute.xlu0 3
      %411 = vperm.xlu0 %410, %v156
      %v412 = vpop.permute.xlu0 %411
      %413 = vset.pattern.permute.xlu0 3
      %414 = vperm.xlu0 %413, %v157
      %v415 = vpop.permute.xlu0 %414
      %416 = vset.pattern.permute.xlu0 3
      %417 = vperm.xlu0 %416, %v158
      %v418 = vpop.permute.xlu0 %417
      %419 = vset.pattern.permute.xlu0 3
      %420 = vperm.xlu0 %419, %v159
      %v421 = vpop.permute.xlu0 %420
      %422 = vset.pattern.permute.xlu0 3
      %423 = vperm.xlu0 %422, %v160
      %v424 = vpop.permute.xlu0 %423
      %425 = vset.pattern.permute.xlu0 3
      %426 = vperm.xlu0 %425, %v161
      %v427 = vpop.permute.xlu0 %426
      %428 = vset.pattern.permute.xlu0 3
      %429 = vperm.xlu0 %428, %v162
      %v430 = vpop.permute.xlu0 %429
      %431 = vset.pattern.permute.xlu0 3
      %432 = vperm.xlu0 %431, %v163
      %v433 = vpop.permute.xlu0 %432
      %434 = vset.pattern.permute.xlu0 3
      %435 = vperm.xlu0 %434, %v164
      %v436 = vpop.permute.xlu0 %435
      %vm437 = vcmp.eq.s32.totalorder %v148, %v391
      %vm438 = vcmp.eq.s32.totalorder %v148, %v394
      %vm439 = vcmp.eq.s32.totalorder %v148, %v397
      %vm440 = vcmp.eq.s32.totalorder %v148, %v400
      %vm441 = vcmp.eq.s32.totalorder %v148, %v403
      %vm442 = vcmp.eq.s32.totalorder %v148, %v406
      %vm443 = vcmp.eq.s32.totalorder %v148, %v409
      %vm444 = vcmp.eq.s32.totalorder %v148, %v412
      %vm445 = vcmp.eq.s32.totalorder %v148, %v415
      %vm446 = vcmp.eq.s32.totalorder %v148, %v418
      %vm447 = vcmp.eq.s32.totalorder %v148, %v421
      %vm448 = vcmp.eq.s32.totalorder %v148, %v424
      %vm449 = vcmp.eq.s32.totalorder %v148, %v427
      %vm450 = vcmp.eq.s32.totalorder %v148, %v430
      %vm451 = vcmp.eq.s32.totalorder %v148, %v433
      %vm452 = vcmp.eq.s32.totalorder %v148, %v436
      %vm453 = vmor %vm373, %vm437
      %vm454 = vmor %vm374, %vm438
      %vm455 = vmor %vm375, %vm439
      %vm456 = vmor %vm376, %vm440
      %vm457 = vmor %vm377, %vm441
      %vm458 = vmor %vm378, %vm442
      %vm459 = vmor %vm379, %vm443
      %vm460 = vmor %vm380, %vm444
      %vm461 = vmor %vm381, %vm445
      %vm462 = vmor %vm382, %vm446
      %vm463 = vmor %vm383, %vm447
      %vm464 = vmor %vm384, %vm448
      %vm465 = vmor %vm385, %vm449
      %vm466 = vmor %vm386, %vm450
      %vm467 = vmor %vm387, %vm451
      %vm468 = vmor %vm388, %vm452
      %v469 = vsel %vm453, 1, 0
      %v470 = vsel %vm454, 1, 0
      %v471 = vsel %vm455, 1, 0
      %v472 = vsel %vm456, 1, 0
      %v473 = vsel %vm457, 1, 0
      %v474 = vsel %vm458, 1, 0
      %v475 = vsel %vm459, 1, 0
      %v476 = vsel %vm460, 1, 0
      %v477 = vsel %vm461, 1, 0
      %v478 = vsel %vm462, 1, 0
      %v479 = vsel %vm463, 1, 0
      %v480 = vsel %vm464, 1, 0
      %v481 = vsel %vm465, 1, 0
      %v482 = vsel %vm466, 1, 0
      %v483 = vsel %vm467, 1, 0
      %v484 = vsel %vm468, 1, 0
      %v485 = vcvt.s32.f32 %v469
      %v486 = vcvt.s32.f32 %v470
      %v487 = vcvt.s32.f32 %v471
      %v488 = vcvt.s32.f32 %v472
      %v489 = vcvt.s32.f32 %v473
      %v490 = vcvt.s32.f32 %v474
      %v491 = vcvt.s32.f32 %v475
      %v492 = vcvt.s32.f32 %v476
      %v493 = vcvt.s32.f32 %v477
      %v494 = vcvt.s32.f32 %v478
      %v495 = vcvt.s32.f32 %v479
      %v496 = vcvt.s32.f32 %v480
      %v497 = vcvt.s32.f32 %v481
      %v498 = vcvt.s32.f32 %v482
      %v499 = vcvt.s32.f32 %v483
      %v500 = vcvt.s32.f32 %v484
      %v501 = vpack.c.bf16 %v486, %v485
      %v502 = vpack.c.bf16 %v488, %v487
      %v503 = vpack.c.bf16 %v490, %v489
      %v504 = vpack.c.bf16 %v492, %v491
      %v505 = vpack.c.bf16 %v494, %v493
      %v506 = vpack.c.bf16 %v496, %v495
      %v507 = vpack.c.bf16 %v498, %v497
      %v508 = vpack.c.bf16 %v500, %v499
      %v509 = vld [vmem:[%s1] sm:$0xf]
      %v510 = vld [vmem:[%s1 + $0x4] sm:$0xf]
      %v511 = vld [vmem:[%s1 + $0x8] sm:$0xf]
      %v512 = vld [vmem:[%s1 + $0xc] sm:$0xf]
      %v513 = vld [vmem:[%s1 + $0x10] sm:$0xf]
      %v514 = vld [vmem:[%s1 + $0x14] sm:$0xf]
      %v515 = vld [vmem:[%s1 + $0x18] sm:$0xf]
      %v516 = vld [vmem:[%s1 + $0x1c] sm:$0xf]
      %v517 = vld [vmem:[%s1 + $0x20] sm:$0xf]
      %v518 = vld [vmem:[%s1 + $0x24] sm:$0xf]
      %v519 = vld [vmem:[%s1 + $0x28] sm:$0xf]
      %v520 = vld [vmem:[%s1 + $0x2c] sm:$0xf]
      %v521 = vld [vmem:[%s1 + $0x30] sm:$0xf]
      %v522 = vld [vmem:[%s1 + $0x34] sm:$0xf]
      %v523 = vld [vmem:[%s1 + $0x38] sm:$0xf]
      %v524 = vld [vmem:[%s1 + $0x3c] sm:$0xf]
      %v541 = vunpack.c.l.b16 %v509
      %v542 = vunpack.c.l.b16 %v510
      %v543 = vunpack.c.l.b16 %v511
      %v544 = vunpack.c.l.b16 %v512
      %v545 = vunpack.c.l.b16 %v513
      %v546 = vunpack.c.l.b16 %v514
      %v547 = vunpack.c.l.b16 %v515
      %v548 = vunpack.c.l.b16 %v516
      %v549 = vunpack.c.l.b16 %v517
      %v550 = vunpack.c.l.b16 %v518
      %v551 = vunpack.c.l.b16 %v519
      %v552 = vunpack.c.l.b16 %v520
      %v553 = vunpack.c.l.b16 %v521
      %v554 = vunpack.c.l.b16 %v522
      %v555 = vunpack.c.l.b16 %v523
      %v556 = vunpack.c.l.b16 %v524
      %v557 = vpack.c.b16 %v542, %v541
      %v558 = vpack.c.b16 %v544, %v543
      %v559 = vpack.c.b16 %v546, %v545
      %v560 = vpack.c.b16 %v548, %v547
      %v561 = vpack.c.b16 %v550, %v549
      %v562 = vpack.c.b16 %v552, %v551
      %v563 = vpack.c.b16 %v554, %v553
      %v564 = vpack.c.b16 %v556, %v555
      %573 = vmatpush.bf16.msra.mxu0 %v564
      %574 = vmatpush.bf16.msra.mxu0 %v563
      %575 = vmatpush.bf16.msra.mxu0 %v562
      %576 = vmatpush.bf16.msra.mxu0 %v561
      %577 = vmatpush.bf16.msra.mxu0 %v560
      %578 = vmatpush.bf16.msra.mxu0 %v559
      %579 = vmatpush.bf16.msra.mxu0 %v558
      %580 = vmatpush.bf16.msra.mxu0 %v557
      %581 = vmatmul.bf16.gmra.mxu0 %v501
      %v582 = vpop.f32.mrf.mxu0
      %v583 = vadd.f32 0.0, %v582
      %v584 = vpop.f32.mrf.mxu0
      %v585 = vadd.f32 0.0, %v584
      %586 = vmatmul.bf16.gmra.mxu0 %v502
      %v587 = vpop.f32.mrf.mxu0
      %v588 = vadd.f32 0.0, %v587
      %v589 = vpop.f32.mrf.mxu0
      %v590 = vadd.f32 0.0, %v589
      %591 = vmatmul.bf16.gmra.mxu0 %v503
      %v592 = vpop.f32.mrf.mxu0
      %v593 = vadd.f32 0.0, %v592
      %v594 = vpop.f32.mrf.mxu0
      %v595 = vadd.f32 0.0, %v594
      %596 = vmatmul.bf16.gmra.mxu0 %v504
      %v597 = vpop.f32.mrf.mxu0
      %v598 = vadd.f32 0.0, %v597
      %v599 = vpop.f32.mrf.mxu0
      %v600 = vadd.f32 0.0, %v599
      %601 = vmatmul.bf16.gmra.mxu0 %v505
      %v602 = vpop.f32.mrf.mxu0
      %v603 = vadd.f32 0.0, %v602
      %v604 = vpop.f32.mrf.mxu0
      %v605 = vadd.f32 0.0, %v604
      %606 = vmatmul.bf16.gmra.mxu0 %v506
      %v607 = vpop.f32.mrf.mxu0
      %v608 = vadd.f32 0.0, %v607
      %v609 = vpop.f32.mrf.mxu0
      %v610 = vadd.f32 0.0, %v609
      %611 = vmatmul.bf16.gmra.mxu0 %v507
      %v612 = vpop.f32.mrf.mxu0
      %v613 = vadd.f32 0.0, %v612
      %v614 = vpop.f32.mrf.mxu0
      %v615 = vadd.f32 0.0, %v614
      %616 = vmatmul.bf16.gmra.mxu0 %v508
      %v617 = vpop.f32.mrf.mxu0
      %v618 = vadd.f32 0.0, %v617
      %v619 = vpop.f32.mrf.mxu0
      %v620 = vadd.f32 0.0, %v619
      %621 = vdwg.mxu0
      %vm622 = vcmask 326656
      %623 = vst.msk [vmem:[%s145] sm:$0xff] %vm622, %v583
      %624 = vst.msk [vmem:[%s145 + $0x8] sm:$0xff] %vm622, %v585
      %625 = vst.msk [vmem:[%s145 + $0x10] sm:$0xff] %vm622, %v588
      %626 = vst.msk [vmem:[%s145 + $0x18] sm:$0xff] %vm622, %v590
      %627 = vst.msk [vmem:[%s145 + $0x20] sm:$0xff] %vm622, %v593
      %628 = vst.msk [vmem:[%s145 + $0x28] sm:$0xff] %vm622, %v595
      %629 = vst.msk [vmem:[%s145 + $0x30] sm:$0xff] %vm622, %v598
      %630 = vst.msk [vmem:[%s145 + $0x38] sm:$0xff] %vm622, %v600
      %631 = vst.msk [vmem:[%s145 + $0x40] sm:$0xff] %vm622, %v603
      %632 = vst.msk [vmem:[%s145 + $0x48] sm:$0xff] %vm622, %v605
      %633 = vst.msk [vmem:[%s145 + $0x50] sm:$0xff] %vm622, %v608
      %634 = vst.msk [vmem:[%s145 + $0x58] sm:$0xff] %vm622, %v610
      %635 = vst.msk [vmem:[%s145 + $0x60] sm:$0xff] %vm622, %v613
      %636 = vst.msk [vmem:[%s145 + $0x68] sm:$0xff] %vm622, %v615
      %637 = vst.msk [vmem:[%s145 + $0x70] sm:$0xff] %vm622, %v618
      %638 = vst.msk [vmem:[%s145 + $0x78] sm:$0xff] %vm622, %v620
      %s639 = smul.u32 16, %s13
      %p640 = scmp.lt.s32.totalorder %s639, 31
      %s641 = scalar_select %p640, %s639, 31
      %s642 = smul.addr %s641, 8
      %s643 = scalar_lea.vmem %s2, %s642
      // Predicated region
      $region29: #{tpu_custom_call.1} parent=27 // pred_check
        %p644 = pneg %p78
      $region30: #{tpu_custom_call.1} parent=27 // pred_check_branch
        %646 = sbr.rel (%p644) target = $region32
      $region31: #{tpu_custom_call.1} parent=27 // pred_region
        %s647 = smul.u32 16, %s13
      $region32: #{tpu_custom_call.1} parent=27 // pred_fallthru
        _
    $region28: #{tpu_custom_call.1} parent=5 // pred_fallthru
      _
    %p648 = scmp.le.s32.totalorder 2, %s8
    // Predicated region
    $region33: #{tpu_custom_call.1} parent=5 // pred_check
      %p649 = pneg %p648
    $region34: #{tpu_custom_call.1} parent=5 // pred_check_branch
      %651 = sbr.rel (%p649) target = $region36
    $region35: #{tpu_custom_call.1} parent=5 // pred_region
      %s652 = ssub.s32 %s8, 2
      // Predicated region
      $region37: #{tpu_custom_call.1} parent=35 // pred_check
        %p653 = pneg %p84
      $region38: #{tpu_custom_call.1} parent=35 // pred_check_branch
        %655 = sbr.rel (%p653) target = $region40
      $region39: #{tpu_custom_call.1} parent=35 // pred_region
        %s656 = smul.u32 16, %s14
        %p657 = scmp.lt.s32.totalorder %s656, 31
        %s658 = scalar_select %p657, %s656, 31
        %s659 = smul.addr %s658, 8
        %s660 = scalar_lea.vmem %s2, %s659
      $region40: #{tpu_custom_call.1} parent=35 // pred_fallthru
        _
    $region36: #{tpu_custom_call.1} parent=5 // pred_fallthru
      _
  $region6: #{tpu_custom_call.1} parent=0 // loop_footer
    %s12 = sadd.s32 1, %s8
  $region7: #{tpu_custom_call.1} parent=0 // loop_footer_branch
    %7 = sbr.rel target = $region3
  $region8: #{tpu_custom_call.1} parent=0 // loop_exit
    _

</llo_original>
